<compile_context>
chip_gen: v5e
topology: v5e:2x2
jax: 0.10.0
libtpu: 0.0.40
codegen_flags: <defaults>
</compile_context>

<pallas_src>
import functools
import math

import jax
import jax.numpy as jnp
from jax.experimental import pallas as pl
from jax.experimental.pallas import tpu as pltpu

LN_EPS = 1e-12  # BertConfig.layer_norm_eps


# ------------------------------ generation-aware budgets ------------------------------

def _vmem_capacity_bytes():
    try:
        return int(pltpu.get_tpu_info().vmem_capacity_bytes)
    except Exception:
        return 64 * 1024 * 1024  # conservative fallback (v7x-sized)


_VMEM_PHYS = _vmem_capacity_bytes()
if _VMEM_PHYS >= 96 * 1024 * 1024:
    # v5e / v6e: 128 MiB physical VMEM -> big scoped budget, big tiles.
    VMEM_LIMIT = 64 * 1024 * 1024
    TM_CAP, TN_CAP, TK_CAP = 512, 1024, 1024
    MLM_TM_CAP, TV_CAP = 1024, 4096
else:
    # v7x (64 MiB physical) or unknown: leave headroom so double-buffering survives.
    VMEM_LIMIT = 40 * 1024 * 1024
    TM_CAP, TN_CAP, TK_CAP = 256, 512, 512
    MLM_TM_CAP, TV_CAP = 512, 2048


def _pick_tile(dim, cap, aligns):
    """Largest tile <= cap that divides dim, preferring larger alignments; else full dim."""
    cap = min(cap, dim)
    for align in aligns:
        t = (cap // align) * align
        while t >= align:
            if dim % t == 0:
                return t
            t -= align
    return dim


def _cparams(sem):
    return pltpu.CompilerParams(dimension_semantics=sem, vmem_limit_bytes=VMEM_LIMIT)


# ------------------------------ Pallas kernels ------------------------------

def _dense_kernel(x_ref, w_ref, b_ref, o_ref, acc_ref, *, activation):
    k = pl.program_id(2)

    @pl.when(k == 0)
    def _():
        acc_ref[...] = jnp.zeros_like(acc_ref)

    acc_ref[...] += jnp.dot(x_ref[...], w_ref[...], preferred_element_type=jnp.float32)

    @pl.when(k == pl.num_programs(2) - 1)
    def _():
        y = acc_ref[...] + b_ref[...]
        if activation == "gelu":
            # TODO(synk): HF BERT uses exact erf-GELU; tanh-approx GELU used here.
            y = jax.nn.gelu(y, approximate=True)
        o_ref[...] = y.astype(o_ref.dtype)


def dense(x, w, b, activation=None, out_dtype=jnp.bfloat16):
    """Tiled matmul: bf16 operands, f32 accumulation, optional GELU epilogue."""
    n, kdim = x.shape
    m = w.shape[1]
    tm = _pick_tile(n, TM_CAP, (16, 8))
    tn = _pick_tile(m, TN_CAP, (256, 128))
    tk = _pick_tile(kdim, TK_CAP, (256, 128))
    grid = (n // tm, m // tn, kdim // tk)
    # TODO(synk): sweep pipeline_mode=pl.Buffered(3) on the weight spec if xprof shows exposed DMA.
    return pl.pallas_call(
        functools.partial(_dense_kernel, activation=activation),
        out_shape=jax.ShapeDtypeStruct((n, m), out_dtype),
        grid=grid,
        in_specs=[
            pl.BlockSpec((tm, tk), lambda i, j, k: (i, k)),
            pl.BlockSpec((tk, tn), lambda i, j, k: (k, j)),
            pl.BlockSpec((1, tn), lambda i, j, k: (0, j)),
        ],
        out_specs=pl.BlockSpec((tm, tn), lambda i, j, k: (i, j)),
        scratch_shapes=[pltpu.VMEM((tm, tn), jnp.float32)],
        compiler_params=_cparams(("parallel", "parallel", "arbitrary")),
    )(x, w, b.reshape(1, m))


def _dense_ln_kernel(*refs, activation, use_residual, eps):
    if use_residual:
        x_ref, w_ref, b_ref, res_ref, g_ref, be_ref, o_ref, acc_ref = refs
    else:
        x_ref, w_ref, b_ref, g_ref, be_ref, o_ref, acc_ref = refs
        res_ref = None
    k = pl.program_id(1)

    @pl.when(k == 0)
    def _():
        acc_ref[...] = jnp.zeros_like(acc_ref)

    acc_ref[...] += jnp.dot(x_ref[...], w_ref[...], preferred_element_type=jnp.float32)

    @pl.when(k == pl.num_programs(1) - 1)
    def _():
        y = acc_ref[...] + b_ref[...]
        if activation == "gelu":
            # TODO(synk): tanh-approx GELU (HF BERT uses exact erf-GELU).
            y = jax.nn.gelu(y, approximate=True)
        if use_residual:
            y = y + res_ref[...].astype(jnp.float32)
        mu = jnp.mean(y, axis=-1, keepdims=True)
        var = jnp.mean((y - mu) ** 2, axis=-1, keepdims=True)
        yn = (y - mu) * jax.lax.rsqrt(var + eps)
        o_ref[...] = (yn * g_ref[...] + be_ref[...]).astype(o_ref.dtype)


def dense_ln(x, w, b, gamma, beta, residual=None, activation=None,
             eps=LN_EPS, out_dtype=jnp.bfloat16):
    """Matmul with fused bias + (optional GELU) + (optional residual) + LayerNorm epilogue."""
    n, kdim = x.shape
    h = w.shape[1]
    tm = _pick_tile(n, TM_CAP, (16, 8))
    tk = _pick_tile(kdim, TK_CAP, (256, 128))
    grid = (n // tm, kdim // tk)
    use_residual = residual is not None

    in_specs = [
        pl.BlockSpec((tm, tk), lambda i, k: (i, k)),
        pl.BlockSpec((tk, h), lambda i, k: (k, 0)),
        pl.BlockSpec((1, h), lambda i, k: (0, 0)),
    ]
    args = [x, w, b.reshape(1, h)]
    if use_residual:
        in_specs.append(pl.BlockSpec((tm, h), lambda i, k: (i, 0)))
        args.append(residual)
    in_specs += [pl.BlockSpec((1, h), lambda i, k: (0, 0)),
                 pl.BlockSpec((1, h), lambda i, k: (0, 0))]
    args += [gamma.reshape(1, h), beta.reshape(1, h)]

    return pl.pallas_call(
        functools.partial(_dense_ln_kernel, activation=activation,
                          use_residual=use_residual, eps=eps),
        out_shape=jax.ShapeDtypeStruct((n, h), out_dtype),
        grid=grid,
        in_specs=in_specs,
        out_specs=pl.BlockSpec((tm, h), lambda i, k: (i, 0)),
        scratch_shapes=[pltpu.VMEM((tm, h), jnp.float32)],
        compiler_params=_cparams(("parallel", "arbitrary")),
    )(*args)


def _dense_heads_kernel(x_ref, w_ref, b_ref, o_ref, acc_ref):
    k = pl.program_id(2)

    @pl.when(k == 0)
    def _():
        acc_ref[...] = jnp.zeros_like(acc_ref)

    acc_ref[...] += jnp.dot(x_ref[...], w_ref[0], preferred_element_type=jnp.float32)

    @pl.when(k == pl.num_programs(2) - 1)
    def _():
        o_ref[0] = (acc_ref[...] + b_ref[0]).astype(o_ref.dtype)


def dense_heads(x, w, b, out_dtype=jnp.bfloat16):
    """Q/K/V projection written directly into head-major (3*nh, tokens, dh) layout.

    w is stored head-major (G, hidden, dh); the output never needs a reshape/transpose
    before attention.
    """
    n, kdim = x.shape
    g, _, dh = w.shape
    tm = _pick_tile(n, TM_CAP, (16, 8))
    tk = _pick_tile(kdim, TK_CAP, (256, 128))
    grid = (n // tm, g, kdim // tk)
    return pl.pallas_call(
        _dense_heads_kernel,
        out_shape=jax.ShapeDtypeStruct((g, n, dh), out_dtype),
        grid=grid,
        in_specs=[
            pl.BlockSpec((tm, tk), lambda i, gi, k: (i, k)),
            pl.BlockSpec((1, tk, dh), lambda i, gi, k: (gi, k, 0)),
            pl.BlockSpec((1, 1, dh), lambda i, gi, k: (gi, 0, 0)),
        ],
        out_specs=pl.BlockSpec((1, tm, dh), lambda i, gi, k: (gi, i, 0)),
        scratch_shapes=[pltpu.VMEM((tm, dh), jnp.float32)],
        compiler_params=_cparams(("parallel", "parallel", "arbitrary")),
    )(x, w, b.reshape(g, 1, dh))


def _attention_kernel(q_ref, k_ref, v_ref, bias_ref, o_ref, *, scale):
    q = q_ref[0]            # (S, dh) bf16
    k = k_ref[0]            # (S, dh) bf16
    v = v_ref[0]            # (S, dh) bf16
    bias = bias_ref[0]      # (1, S) f32 additive mask, broadcast over query rows
    s = jax.lax.dot_general(q, k, (((1,), (1,)), ((), ())),
                            preferred_element_type=jnp.float32) * scale
    s = s + bias
    m = jnp.max(s, axis=-1, keepdims=True)
    p = jnp.exp(s - m)
    denom = jnp.sum(p, axis=-1, keepdims=True)
    p = p * pl.reciprocal(denom, approx=True)
    o = jnp.dot(p.astype(v.dtype), v, preferred_element_type=jnp.float32)
    o_ref[0] = o.astype(o_ref.dtype)


def attention(qkv, bias, n_heads, seq, scale):
    """One (batch, head) pair per grid step; context stays head-major (nh, tokens, dh).

    qkv: (3*nh, tokens, dh); Q heads first, then K heads, then V heads.
    TODO(synk): add flash-style query-block tiling (online softmax) for seq >= ~1k, and
    pack 128//dh heads per output block when dh < 128 to keep stores lane-dense.
    """
    g, tokens, dh = qkv.shape
    b = tokens // seq
    return pl.pallas_call(
        functools.partial(_attention_kernel, scale=scale),
        out_shape=jax.ShapeDtypeStruct((n_heads, tokens, dh), jnp.bfloat16),
        grid=(b, n_heads),
        in_specs=[
            pl.BlockSpec((1, seq, dh), lambda bi, h: (h, bi, 0)),
            pl.BlockSpec((1, seq, dh), lambda bi, h: (n_heads + h, bi, 0)),
            pl.BlockSpec((1, seq, dh), lambda bi, h: (2 * n_heads + h, bi, 0)),
            pl.BlockSpec((1, 1, seq), lambda bi, h: (bi, 0, 0)),
        ],
        out_specs=pl.BlockSpec((1, seq, dh), lambda bi, h: (h, bi, 0)),
        compiler_params=_cparams(("parallel", "parallel")),
    )(qkv, qkv, qkv, bias)


def _dense_ln_heads_kernel(x_ref, w_ref, b_ref, res_ref, g_ref, be_ref, o_ref, acc_ref, *, eps):
    h = pl.program_id(1)

    @pl.when(h == 0)
    def _():
        acc_ref[...] = jnp.zeros_like(acc_ref)

    acc_ref[...] += jnp.dot(x_ref[0], w_ref[0], preferred_element_type=jnp.float32)

    @pl.when(h == pl.num_programs(1) - 1)
    def _():
        y = acc_ref[...] + b_ref[...] + res_ref[...].astype(jnp.float32)
        mu = jnp.mean(y, axis=-1, keepdims=True)
        var = jnp.mean((y - mu) ** 2, axis=-1, keepdims=True)
        yn = (y - mu) * jax.lax.rsqrt(var + eps)
        o_ref[...] = (yn * g_ref[...] + be_ref[...]).astype(o_ref.dtype)


def dense_ln_heads(ctx, w, b, gamma, beta, residual, eps=LN_EPS, out_dtype=jnp.bfloat16):
    """Attention-output projection consuming head-major context directly.

    ctx: (nh, tokens, dh); w: (nh, dh, hidden). The head axis is the matmul reduction
    axis (grid 'arbitrary'), so no head-merge transpose of the activations is needed.
    Fused bias + residual + LayerNorm epilogue.
    """
    nh, n, dh = ctx.shape
    hidden = w.shape[2]
    tm = _pick_tile(n, TM_CAP, (16, 8))
    grid = (n // tm, nh)
    return pl.pallas_call(
        functools.partial(_dense_ln_heads_kernel, eps=eps),
        out_shape=jax.ShapeDtypeStruct((n, hidden), out_dtype),
        grid=grid,
        in_specs=[
            pl.BlockSpec((1, tm, dh), lambda i, h: (h, i, 0)),
            pl.BlockSpec((1, dh, hidden), lambda i, h: (h, 0, 0)),
            pl.BlockSpec((1, hidden), lambda i, h: (0, 0)),
            pl.BlockSpec((tm, hidden), lambda i, h: (i, 0)),
            pl.BlockSpec((1, hidden), lambda i, h: (0, 0)),
            pl.BlockSpec((1, hidden), lambda i, h: (0, 0)),
        ],
        out_specs=pl.BlockSpec((tm, hidden), lambda i, h: (i, 0)),
        scratch_shapes=[pltpu.VMEM((tm, hidden), jnp.float32)],
        compiler_params=_cparams(("parallel", "arbitrary")),
    )(ctx, w, b.reshape(1, hidden), residual,
      gamma.reshape(1, hidden), beta.reshape(1, hidden))


def _embed_ln_kernel(x_ref, pos_ref, typ_ref, g_ref, b_ref, o_ref, *, eps):
    y = (x_ref[0].astype(jnp.float32) + pos_ref[...].astype(jnp.float32)
         + typ_ref[...].astype(jnp.float32))
    mu = jnp.mean(y, axis=-1, keepdims=True)
    var = jnp.mean((y - mu) ** 2, axis=-1, keepdims=True)
    yn = (y - mu) * jax.lax.rsqrt(var + eps)
    o_ref[0] = (yn * g_ref[...] + b_ref[...]).astype(o_ref.dtype)


def embed_layernorm(inputs_embeds, pos_emb, type_vec, gamma, beta,
                    eps=LN_EPS, out_dtype=jnp.bfloat16):
    """Fused (word + position + token-type) embedding sum + LayerNorm."""
    bsz, seq, hidden = inputs_embeds.shape
    return pl.pallas_call(
        functools.partial(_embed_ln_kernel, eps=eps),
        out_shape=jax.ShapeDtypeStruct((bsz, seq, hidden), out_dtype),
        grid=(bsz,),
        in_specs=[
            pl.BlockSpec((1, seq, hidden), lambda i: (i, 0, 0)),
            pl.BlockSpec((seq, hidden), lambda i: (0, 0)),
            pl.BlockSpec((1, hidden), lambda i: (0, 0)),
            pl.BlockSpec((1, hidden), lambda i: (0, 0)),
            pl.BlockSpec((1, hidden), lambda i: (0, 0)),
        ],
        out_specs=pl.BlockSpec((1, seq, hidden), lambda i: (i, 0, 0)),
        compiler_params=_cparams(("parallel",)),
    )(inputs_embeds, pos_emb, type_vec.reshape(1, hidden),
      gamma.reshape(1, hidden), beta.reshape(1, hidden))


def _mlm_head_kernel(h_ref, emb_ref, db_ref, lab_ref, stats_ref, m_acc, l_acc, t_acc, *, tv):
    """Fused decoder matmul (tied embedding, last-dim contraction) + online-LSE CE loss."""
    j = pl.program_id(1)

    @pl.when(j == 0)
    def _():
        m_acc[...] = jnp.full_like(m_acc, -1e30)
        l_acc[...] = jnp.zeros_like(l_acc)
        t_acc[...] = jnp.zeros_like(t_acc)

    # logits tile (tm, tv) = h . word_emb[j-tile]^T + decoder_bias[j-tile]
    # TODO(synk): confirm via pl.lower_as_mlir that no per-step XLU transpose of the
    # (tv, hid) tile is emitted; if it is, pre-transpose word_emb to (hidden, vocab) once.
    logits = jax.lax.dot_general(h_ref[...], emb_ref[...], (((1,), (1,)), ((), ())),
                                 preferred_element_type=jnp.float32) + db_ref[...]
    labels = lab_ref[...]                                    # (tm, 1) int32, -100 == ignore
    vocab_ids = jax.lax.broadcasted_iota(jnp.int32, logits.shape, 1) + j * tv
    onehot = (vocab_ids == labels).astype(jnp.float32)
    t_acc[...] += jnp.sum(logits * onehot, axis=-1, keepdims=True)

    m_new = jnp.maximum(m_acc[...], jnp.max(logits, axis=-1, keepdims=True))
    l_acc[...] = (l_acc[...] * jnp.exp(m_acc[...] - m_new)
                  + jnp.sum(jnp.exp(logits - m_new), axis=-1, keepdims=True))
    m_acc[...] = m_new

    @pl.when(j == pl.num_programs(1) - 1)
    def _():
        lse = m_acc[...] + jnp.log(l_acc[...])
        valid = (lab_ref[...] != -100).astype(jnp.float32)
        nll = (lse - t_acc[...]) * valid                     # (tm, 1)
        # Lane-dense per-tile reduction: lane 0 = sum of NLL, lane 1 = valid-token count.
        lane = jax.lax.broadcasted_iota(jnp.int32, (1, 1, 128), 2)
        stats_ref[...] = jnp.where(lane == 0, jnp.sum(nll),
                                   jnp.where(lane == 1, jnp.sum(valid), 0.0))


def mlm_head_loss(h, word_emb, decoder_b, labels):
    """CrossEntropyLoss(ignore_index=-100) over tied-embedding logits, never in HBM."""
    n, hid = h.shape
    v = word_emb.shape[0]
    tm = _pick_tile(n, MLM_TM_CAP, (16, 8))
    tv = _pick_tile(v, TV_CAP, (256, 128))
    # TODO(synk): a vocab with no 128-aligned divisor (e.g. 50257) falls back to the full
    # table as one block and will blow VMEM; pad the vocab to a multiple of 128 upstream.
    stats = pl.pallas_call(
        functools.partial(_mlm_head_kernel, tv=tv),
        out_shape=jax.ShapeDtypeStruct((n // tm, 1, 128), jnp.float32),
        grid=(n // tm, v // tv),
        in_specs=[
            pl.BlockSpec((tm, hid), lambda i, j: (i, 0)),
            pl.BlockSpec((tv, hid), lambda i, j: (j, 0)),
            pl.BlockSpec((1, tv), lambda i, j: (0, j)),
            pl.BlockSpec((tm, 1), lambda i, j: (i, 0)),
        ],
        out_specs=pl.BlockSpec((1, 1, 128), lambda i, j: (i, 0, 0)),
        scratch_shapes=[pltpu.VMEM((tm, 1), jnp.float32)] * 3,
        compiler_params=_cparams(("parallel", "arbitrary")),
    )(h, word_emb, decoder_b.reshape(1, v), labels)
    total_nll = jnp.sum(stats[:, 0, 0])
    count = jnp.maximum(jnp.sum(stats[:, 0, 1]), 1.0)   # no masked token -> loss 0, not NaN
    return total_nll / count


# ------------------------------ BERT (2-layer) model glue ------------------------------

def init_params(key, vocab, hidden, n_layers, intermediate, max_pos, n_heads):
    dh = hidden // n_heads
    keys = iter(jax.random.split(key, 8 + 8 * n_layers))

    def w(shape, scale=0.02, dtype=jnp.bfloat16):
        return (scale * jax.random.normal(next(keys), shape)).astype(dtype)

    params = {
        "word_emb": w((vocab, hidden)),   # tied decoder weight (contracted on its last dim)
        "pos_emb": w((max_pos, hidden)),
        "type_emb": w((2, hidden)),
        "emb_ln_g": jnp.ones((hidden,), jnp.float32),
        "emb_ln_b": jnp.zeros((hidden,), jnp.float32),
        "mlm_dense_w": w((hidden, hidden)),
        "mlm_dense_b": jnp.zeros((hidden,), jnp.float32),
        "mlm_ln_g": jnp.ones((hidden,), jnp.float32),
        "mlm_ln_b": jnp.zeros((hidden,), jnp.float32),
        "decoder_b": jnp.zeros((vocab,), jnp.float32),
        "layers": [],
    }
    for _ in range(n_layers):
        params["layers"].append({
            # Q/K/V and attention-output weights stored head-major so kernels read/write
            # per-head blocks with no activation transposes (one-time checkpoint relayout
            # when porting the PyTorch weights).
            "qkv_w": w((3 * n_heads, hidden, dh)),
            "qkv_b": jnp.zeros((3 * n_heads, dh), jnp.float32),
            "ao_w": w((n_heads, dh, hidden)),
            "ao_b": jnp.zeros((hidden,), jnp.float32),
            "attn_ln_g": jnp.ones((hidden,), jnp.float32),
            "attn_ln_b": jnp.zeros((hidden,), jnp.float32),
            "i_w": w((hidden, intermediate)),
            "i_b": jnp.zeros((intermediate,), jnp.float32),
            "o_w": w((intermediate, hidden)),
            "o_b": jnp.zeros((hidden,), jnp.float32),
            "out_ln_g": jnp.ones((hidden,), jnp.float32),
            "out_ln_b": jnp.zeros((hidden,), jnp.float32),
        })
    return params


def bert_layer(x, bias, p, seq, n_heads):
    dh = p["qkv_w"].shape[2]
    # Fused Q/K/V projection straight into head-major (3*nh, tokens, dh) layout.
    qkv = dense_heads(x, p["qkv_w"], p["qkv_b"])
    # Per-(batch, head) attention; context stays head-major (nh, tokens, dh).
    ctx = attention(qkv, bias, n_heads=n_heads, seq=seq, scale=1.0 / math.sqrt(dh))
    # Attention-output projection (head axis = matmul reduction) + residual + LayerNorm.
    x = dense_ln_heads(ctx, p["ao_w"], p["ao_b"], p["attn_ln_g"], p["attn_ln_b"], residual=x)
    # FFN: intermediate matmul + GELU, then output matmul + residual + LayerNorm (fused).
    inter = dense(x, p["i_w"], p["i_b"], activation="gelu")
    x = dense_ln(inter, p["o_w"], p["o_b"], p["out_ln_g"], p["out_ln_b"], residual=x)
    return x


def bert_mlm_forward(params, inputs_embeds, attention_mask, labels, n_heads):
    batch, seq, hidden = inputs_embeds.shape
    # word + position + token-type embeddings fused with the embedding LayerNorm.
    x = embed_layernorm(inputs_embeds, params["pos_emb"][:seq], params["type_emb"][0],
                        params["emb_ln_g"], params["emb_ln_b"])
    x = x.reshape(batch * seq, hidden)
    # TODO(synk): BERT dropout layers omitted (deterministic eval-mode forward).
    ext_bias = ((1.0 - attention_mask) * -10000.0).astype(jnp.float32)[:, None, :]  # (B,1,S)
    for p in params["layers"]:
        x = bert_layer(x, ext_bias, p, seq, n_heads)

    # MLM prediction head: transform (dense + GELU + LN fused), then decoder + loss fused.
    h = dense_ln(x, params["mlm_dense_w"], params["mlm_dense_b"],
                 params["mlm_ln_g"], params["mlm_ln_b"], residual=None, activation="gelu")
    labels = labels.reshape(batch * seq, 1).astype(jnp.int32)
    return mlm_head_loss(h, params["word_emb"], params["decoder_b"], labels)


def fact_reconstructor_forward(params, input_ids, rng, n_heads=4, cls_hidden=None):
    # input_ids: (seq, batch, 1) int32, as produced upstream in the PyTorch pipeline.
    ids = jnp.squeeze(input_ids, axis=-1)          # (S, B)
    ids = jnp.transpose(ids, (1, 0))               # (B, S)

    # (ids == 50163) * (ids == 49968) is a logical AND (always false), kept verbatim.
    not_include = jnp.where((ids == 50163) & (ids == 49968),
                            jnp.ones_like(ids), jnp.zeros_like(ids))
    mask_prob = jax.random.uniform(rng, ids.shape) > 0.8
    attention_mask = jnp.where(mask_prob,
                               jnp.ones(ids.shape, jnp.float32),
                               jnp.zeros(ids.shape, jnp.float32))
    attention_mask = jnp.where(not_include == 1,
                               jnp.zeros_like(attention_mask), attention_mask)

    input_embeddings = jnp.take(params["word_emb"], ids, axis=0)        # (B, S, H) bf16
    labels = jnp.where(attention_mask > 0, ids, jnp.full_like(ids, -100))

    if cls_hidden is not None:
        cls_hidden = cls_hidden.astype(input_embeddings.dtype)
        input_embeddings = jnp.concatenate([cls_hidden[:, None, :], input_embeddings], axis=1)
        attention_mask = jnp.concatenate(
            [jnp.ones((attention_mask.shape[0], 1), attention_mask.dtype), attention_mask], axis=1)
        labels = jnp.concatenate(
            [jnp.full((labels.shape[0], 1), -100, labels.dtype), labels], axis=1)

    return bert_mlm_forward(params, input_embeddings, attention_mask, labels, n_heads)


# ------------------------------ run ------------------------------

if __name__ == "__main__":
    # Scaled-down config (module config: layers=2, heads=4, intermediate=256;
    # hidden/vocab reduced for this synthetic run).
    VOCAB, HIDDEN, LAYERS, HEADS, INTER, MAXPOS = 512, 64, 2, 4, 256, 64
    SEQ, BATCH = 8, 2

    key = jax.random.PRNGKey(0)
    k_param, k_ids, k_mask = jax.random.split(key, 3)

    params = init_params(k_param, VOCAB, HIDDEN, LAYERS, INTER, MAXPOS, HEADS)
    input_ids = jax.random.randint(k_ids, (SEQ, BATCH, 1), 0, VOCAB, dtype=jnp.int32)

    loss = fact_reconstructor_forward(params, input_ids, k_mask, n_heads=HEADS)
    jax.block_until_ready(loss)
    print("KERNEL_OK")
</pallas_src>

<mosaic_0001>
module attributes {stable_mosaic.version = 11 : i64} {
  func.func @_embed_ln_kernel(%arg0: i32, %arg1: memref<1x8x64xbf16, #tpu.memory_space<vmem>>, %arg2: memref<8x64xbf16, #tpu.memory_space<vmem>>, %arg3: memref<1x64xbf16, #tpu.memory_space<vmem>>, %arg4: memref<1x64xf32, #tpu.memory_space<vmem>>, %arg5: memref<1x64xf32, #tpu.memory_space<vmem>>, %arg6: memref<1x8x64xbf16, #tpu.memory_space<vmem>>) attributes {dimension_semantics = [#tpu.dimension_semantics<parallel>], iteration_bounds = array<i64: 2>, scalar_prefetch = 0 : i64, scratch_operands = 0 : i64, tpu.core_type = #tpu.core_type<tc>, window_params = [{transform_indices = @transform_0, window_bounds = array<i64: 1, 8, 64>}, {pipeline_mode = #tpu.pipeline_mode<synchronous>, transform_indices = @transform_1, window_bounds = array<i64: 8, 64>}, {pipeline_mode = #tpu.pipeline_mode<synchronous>, transform_indices = @transform_2, window_bounds = array<i64: 1, 64>}, {pipeline_mode = #tpu.pipeline_mode<synchronous>, transform_indices = @transform_3, window_bounds = array<i64: 1, 64>}, {pipeline_mode = #tpu.pipeline_mode<synchronous>, transform_indices = @transform_4, window_bounds = array<i64: 1, 64>}, {transform_indices = @transform_5, window_bounds = array<i64: 1, 8, 64>}]} {
    %c0 = arith.constant 0 : index
    %c0_0 = arith.constant 0 : index
    %c0_1 = arith.constant 0 : index
    %0 = vector.load %arg1[%c0, %c0_0, %c0_1] : memref<1x8x64xbf16, #tpu.memory_space<vmem>>, vector<1x8x64xbf16>
    %1 = vector.shape_cast %0 : vector<1x8x64xbf16> to vector<8x64xbf16>
    %2 = arith.extf %1 : vector<8x64xbf16> to vector<8x64xf32>
    %c0_2 = arith.constant 0 : index
    %c0_3 = arith.constant 0 : index
    %3 = vector.load %arg2[%c0_2, %c0_3] : memref<8x64xbf16, #tpu.memory_space<vmem>>, vector<8x64xbf16>
    %4 = arith.extf %3 : vector<8x64xbf16> to vector<8x64xf32>
    %5 = arith.addf %2, %4 : vector<8x64xf32>
    %c0_4 = arith.constant 0 : index
    %c0_5 = arith.constant 0 : index
    %6 = vector.load %arg3[%c0_4, %c0_5] : memref<1x64xbf16, #tpu.memory_space<vmem>>, vector<1x64xbf16>
    %7 = arith.extf %6 : vector<1x64xbf16> to vector<1x64xf32>
    %8 = vector.broadcast %7 : vector<1x64xf32> to vector<8x64xf32>
    %9 = arith.addf %5, %8 : vector<8x64xf32>
    %cst = arith.constant dense<0.000000e+00> : vector<8xf32>
    %10 = vector.multi_reduction <add>, %9, %cst [1] : vector<8x64xf32> to vector<8xf32>
    %11 = vector.shape_cast %10 : vector<8xf32> to vector<8x1xf32>
    %cst_6 = arith.constant 6.400000e+01 : f32
    %12 = vector.broadcast %cst_6 : f32 to vector<8x1xf32>
    %13 = arith.divf %11, %12 : vector<8x1xf32>
    %14 = vector.broadcast %13 : vector<8x1xf32> to vector<8x64xf32>
    %15 = arith.subf %9, %14 : vector<8x64xf32>
    %16 = arith.mulf %15, %15 : vector<8x64xf32>
    %cst_7 = arith.constant dense<0.000000e+00> : vector<8xf32>
    %17 = vector.multi_reduction <add>, %16, %cst_7 [1] : vector<8x64xf32> to vector<8xf32>
    %18 = vector.shape_cast %17 : vector<8xf32> to vector<8x1xf32>
    %cst_8 = arith.constant 6.400000e+01 : f32
    %19 = vector.broadcast %cst_8 : f32 to vector<8x1xf32>
    %20 = arith.divf %18, %19 : vector<8x1xf32>
    %21 = vector.broadcast %13 : vector<8x1xf32> to vector<8x64xf32>
    %22 = arith.subf %9, %21 : vector<8x64xf32>
    %cst_9 = arith.constant 9.99999996E-13 : f32
    %23 = vector.broadcast %cst_9 : f32 to vector<8x1xf32>
    %24 = arith.addf %20, %23 : vector<8x1xf32>
    %25 = math.rsqrt %24 : vector<8x1xf32>
    %26 = vector.broadcast %25 : vector<8x1xf32> to vector<8x64xf32>
    %27 = arith.mulf %22, %26 : vector<8x64xf32>
    %c0_10 = arith.constant 0 : index
    %c0_11 = arith.constant 0 : index
    %28 = vector.load %arg4[%c0_10, %c0_11] : memref<1x64xf32, #tpu.memory_space<vmem>>, vector<1x64xf32>
    %29 = vector.broadcast %28 : vector<1x64xf32> to vector<8x64xf32>
    %30 = arith.mulf %27, %29 : vector<8x64xf32>
    %c0_12 = arith.constant 0 : index
    %c0_13 = arith.constant 0 : index
    %31 = vector.load %arg5[%c0_12, %c0_13] : memref<1x64xf32, #tpu.memory_space<vmem>>, vector<1x64xf32>
    %32 = vector.broadcast %31 : vector<1x64xf32> to vector<8x64xf32>
    %33 = arith.addf %30, %32 : vector<8x64xf32>
    %34 = arith.truncf %33 : vector<8x64xf32> to vector<8x64xbf16>
    %c0_14 = arith.constant 0 : index
    %c0_15 = arith.constant 0 : index
    %c0_16 = arith.constant 0 : index
    %35 = vector.load %arg6[%c0_14, %c0_15, %c0_16] : memref<1x8x64xbf16, #tpu.memory_space<vmem>>, vector<1x8x64xbf16>
    %36 = vector.shape_cast %35 : vector<1x8x64xbf16> to vector<8x64xbf16>
    %37 = vector.shape_cast %34 : vector<8x64xbf16> to vector<1x8x64xbf16>
    tpu.vector_store %arg6[%c0_14, %c0_15, %c0_16], %37 {strides = array<i32>} : memref<1x8x64xbf16, #tpu.memory_space<vmem>>, vector<1x8x64xbf16>,
    return
  }
  func.func @transform_0(%arg0: i32) -> (i32, i32, i32) {
    %c0_i32 = arith.constant 0 : i32
    %c0_i32_0 = arith.constant 0 : i32
    %c0_i32_1 = arith.constant 0 : i32
    return %arg0, %c0_i32, %c0_i32_0 : i32, i32, i32
  }
  func.func @transform_1(%arg0: i32) -> (i32, i32) {
    %c0_i32 = arith.constant 0 : i32
    %c0_i32_0 = arith.constant 0 : i32
    %c0_i32_1 = arith.constant 0 : i32
    return %c0_i32, %c0_i32_0 : i32, i32
  }
  func.func @transform_2(%arg0: i32) -> (i32, i32) {
    %c0_i32 = arith.constant 0 : i32
    %c0_i32_0 = arith.constant 0 : i32
    %c0_i32_1 = arith.constant 0 : i32
    return %c0_i32, %c0_i32_0 : i32, i32
  }
  func.func @transform_3(%arg0: i32) -> (i32, i32) {
    %c0_i32 = arith.constant 0 : i32
    %c0_i32_0 = arith.constant 0 : i32
    %c0_i32_1 = arith.constant 0 : i32
    return %c0_i32, %c0_i32_0 : i32, i32
  }
  func.func @transform_4(%arg0: i32) -> (i32, i32) {
    %c0_i32 = arith.constant 0 : i32
    %c0_i32_0 = arith.constant 0 : i32
    %c0_i32_1 = arith.constant 0 : i32
    return %c0_i32, %c0_i32_0 : i32, i32
  }
  func.func @transform_5(%arg0: i32) -> (i32, i32, i32) {
    %c0_i32 = arith.constant 0 : i32
    %c0_i32_0 = arith.constant 0 : i32
    %c0_i32_1 = arith.constant 0 : i32
    return %arg0, %c0_i32, %c0_i32_0 : i32, i32, i32
  }
}

</mosaic_0001>

<llo_original>
// kernel: tpu_custom_call.1
$region0: #{tpu_custom_call.1}
  #allocation0 [shape = 'u32[]', space=smem, size = 0x4, offset = 0x4, fixed_abs, tag = 'smem constant byte address 0x4 - core index']
  #allocation1 [shape = 'u32[72,128]{1,0:T(1,128)}', space=vmem, size = 0x9000, scoped, tag = 'internal scratch']
  %s0 = inlined_call_operand.hbm [shape: bf16[2,8,64], index: 0, kind: input, shape index: {}]
  %s1 = inlined_call_operand.hbm [shape: bf16[8,64], index: 1, kind: input, shape index: {}]
  %s2 = inlined_call_operand.vmem [shape: bf16[1,64], index: 2, kind: input, shape index: {}]
  %s3 = inlined_call_operand.vmem [shape: f32[1,64], index: 3, kind: input, shape index: {}]
  %s4 = inlined_call_operand.vmem [shape: f32[1,64], index: 4, kind: input, shape index: {}]
  %s5 = inlined_call_operand.hbm [shape: bf16[2,8,64], index: 5, kind: output, shape index: {}]
  %s6 = sld [smem:[#allocation0]]
  $region61: #{tpu_custom_call.1} parent=0
    _
  %s8 = ssub.s32 1, %s6
  %s9 = scalar_select 0, %s8, %s6
  $region1: #{tpu_custom_call.1} parent=0
    #allocation2 [shape = 'u8[4096]{0}', space=vmem, size = 0x1000, scoped, tag = 'input window, operand 0']
    #allocation3 [shape = 's32[2]{0}', space=sflag, size = 0x8, scoped, tag = 'scoped memory for tpu_custom_call.1']
    #allocation4 [shape = 's32[2]{0}', space=sflag, size = 0x8, scoped, tag = 'scoped memory for tpu_custom_call.1']
    #allocation5 [shape = 'u8[2048]{0}', space=vmem, size = 0x800, scoped, tag = 'input window, operand 1, single buffered']
    #allocation6 [shape = 's32[1]{0}', space=sflag, size = 0x4, scoped, tag = 'scoped memory for tpu_custom_call.1']
    #allocation7 [shape = 'u8[4096]{0}', space=vmem, size = 0x1000, scoped, tag = 'output window, operand 0']
    %10 = vsyncpa [#allocation3], 0
    %s11 = scalar_lea.sflag [#allocation3], 1
    %12 = vsyncpa %s11, 0
    %13 = vsyncpa [#allocation6], 0
    %14 = vsyncpa [#allocation4], 0
    %s15 = scalar_lea.sflag [#allocation4], 1
    %16 = vsyncpa %s15, 0
    loop: start=0, step=1, limit=4
    $region2: #{tpu_custom_call.1} parent=1 // loop_pre_header
      _
    $region3: #{tpu_custom_call.1} parent=1 // loop_header
      %s18 = sphi 0, %s22
      %p19 = scmp.ge.s32.totalorder %s18, 4
      %s28 = sphi 0, %s30
      %s31 = sphi 0, %s28
      %s32 = sphi 0, %s31
      %s48 = sphi 0, %s32
      %s52 = sphi 0, %s52
      %s54 = sphi 0, %s52
      %s55 = sphi 0, %s54
      %s69 = sphi 0, %s55
      %s73 = sphi 0, %s73
      %s75 = sphi 0, %s73
      %s76 = sphi 0, %s75
      %s90 = sphi 0, %s76
      %s94 = sphi 0, %s94
      %s96 = sphi 0, %s94
      %s97 = sphi 0, %s96
      %s111 = sphi 0, %s97
      %s115 = sphi 0, %s115
      %s117 = sphi 0, %s115
      %s118 = sphi 0, %s117
      %s132 = sphi 0, %s118
      %s138 = sphi 0, %s140
      %s141 = sphi 0, %s138
      %s142 = sphi 0, %s141
      %s158 = sphi 0, %s142
    $region4: #{tpu_custom_call.1} parent=1 // loop_header_branch
      %21 = sbr.rel (%p19) target = $region8
    $region5: #{tpu_custom_call.1} parent=1 // loop_body
      %s23 = ssub.s32 %s18, 1
      %s24 = ssub.s32 %s18, 2
      %s25 = sadd.s32 %s18, 1
      %s26 = ssub.s32 %s18, %s25
      %p27 = scmp.eq.s32.totalorder %s26, 0
      %s29 = sadd.s32 %s28, 1
      %s30 = scalar_select %p27, %s28, %s29
      %p33 = pneg %p27
      %p34 = scmp.eq.s32.totalorder %s18, 1
      %p35 = por %p33, %p34
      %p36 = scmp.ne.s32.totalorder %s28, %s31
      %p37 = scmp.eq.s32.totalorder %s18, 0
      %p38 = por %p36, %p37
      %p39 = scmp.ne.s32.totalorder %s28, %s31
      %p40 = scmp.eq.s32.totalorder %s23, 1
      %p41 = por %p39, %p40
      %p42 = scmp.ne.s32.totalorder %s31, %s32
      %p43 = scmp.eq.s32.totalorder %s23, 0
      %p44 = por %p42, %p43
      %p45 = scmp.ne.s32.totalorder %s31, %s32
      %p46 = scmp.eq.s32.totalorder %s24, 1
      %p47 = por %p45, %p46
      %p49 = scmp.ne.s32.totalorder %s32, %s48
      %p50 = scmp.eq.s32.totalorder %s24, 0
      %p51 = por %p49, %p50
      %s53 = sadd.s32 %s52, 1
      %p56 = scmp.eq.s32.totalorder %s18, 1
      %p57 = scmp.ne.s32.totalorder %s52, %s54
      %p58 = scmp.eq.s32.totalorder %s18, 0
      %p59 = por %p57, %p58
      %p60 = scmp.ne.s32.totalorder %s52, %s54
      %p61 = scmp.eq.s32.totalorder %s23, 1
      %p62 = por %p60, %p61
      %p63 = scmp.ne.s32.totalorder %s54, %s55
      %p64 = scmp.eq.s32.totalorder %s23, 0
      %p65 = por %p63, %p64
      %p66 = scmp.ne.s32.totalorder %s54, %s55
      %p67 = scmp.eq.s32.totalorder %s24, 1
      %p68 = por %p66, %p67
      %p70 = scmp.ne.s32.totalorder %s55, %s69
      %p71 = scmp.eq.s32.totalorder %s24, 0
      %p72 = por %p70, %p71
      %s74 = sadd.s32 %s73, 1
      %p77 = scmp.eq.s32.totalorder %s18, 1
      %p78 = scmp.ne.s32.totalorder %s73, %s75
      %p79 = scmp.eq.s32.totalorder %s18, 0
      %p80 = por %p78, %p79
      %p81 = scmp.ne.s32.totalorder %s73, %s75
      %p82 = scmp.eq.s32.totalorder %s23, 1
      %p83 = por %p81, %p82
      %p84 = scmp.ne.s32.totalorder %s75, %s76
      %p85 = scmp.eq.s32.totalorder %s23, 0
      %p86 = por %p84, %p85
      %p87 = scmp.ne.s32.totalorder %s75, %s76
      %p88 = scmp.eq.s32.totalorder %s24, 1
      %p89 = por %p87, %p88
      %p91 = scmp.ne.s32.totalorder %s76, %s90
      %p92 = scmp.eq.s32.totalorder %s24, 0
      %p93 = por %p91, %p92
      %s95 = sadd.s32 %s94, 1
      %p98 = scmp.eq.s32.totalorder %s18, 1
      %p99 = scmp.ne.s32.totalorder %s94, %s96
      %p100 = scmp.eq.s32.totalorder %s18, 0
      %p101 = por %p99, %p100
      %p102 = scmp.ne.s32.totalorder %s94, %s96
      %p103 = scmp.eq.s32.totalorder %s23, 1
      %p104 = por %p102, %p103
      %p105 = scmp.ne.s32.totalorder %s96, %s97
      %p106 = scmp.eq.s32.totalorder %s23, 0
      %p107 = por %p105, %p106
      %p108 = scmp.ne.s32.totalorder %s96, %s97
      %p109 = scmp.eq.s32.totalorder %s24, 1
      %p110 = por %p108, %p109
      %p112 = scmp.ne.s32.totalorder %s97, %s111
      %p113 = scmp.eq.s32.totalorder %s24, 0
      %p114 = por %p112, %p113
      %s116 = sadd.s32 %s115, 1
      %p119 = scmp.eq.s32.totalorder %s18, 1
      %p120 = scmp.ne.s32.totalorder %s115, %s117
      %p121 = scmp.eq.s32.totalorder %s18, 0
      %p122 = por %p120, %p121
      %p123 = scmp.ne.s32.totalorder %s115, %s117
      %p124 = scmp.eq.s32.totalorder %s23, 1
      %p125 = por %p123, %p124
      %p126 = scmp.ne.s32.totalorder %s117, %s118
      %p127 = scmp.eq.s32.totalorder %s23, 0
      %p128 = por %p126, %p127
      %p129 = scmp.ne.s32.totalorder %s117, %s118
      %p130 = scmp.eq.s32.totalorder %s24, 1
      %p131 = por %p129, %p130
      %p133 = scmp.ne.s32.totalorder %s118, %s132
      %p134 = scmp.eq.s32.totalorder %s24, 0
      %p135 = por %p133, %p134
      %s136 = ssub.s32 %s18, %s25
      %p137 = scmp.eq.s32.totalorder %s136, 0
      %s139 = sadd.s32 %s138, 1
      %s140 = scalar_select %p137, %s138, %s139
      %p143 = pneg %p137
      %p144 = scmp.eq.s32.totalorder %s18, 1
      %p145 = por %p143, %p144
      %p146 = scmp.ne.s32.totalorder %s138, %s141
      %p147 = scmp.eq.s32.totalorder %s18, 0
      %p148 = por %p146, %p147
      %p149 = scmp.ne.s32.totalorder %s138, %s141
      %p150 = scmp.eq.s32.totalorder %s23, 1
      %p151 = por %p149, %p150
      %p152 = scmp.ne.s32.totalorder %s141, %s142
      %p153 = scmp.eq.s32.totalorder %s23, 0
      %p154 = por %p152, %p153
      %p155 = scmp.ne.s32.totalorder %s141, %s142
      %p156 = scmp.eq.s32.totalorder %s24, 1
      %p157 = por %p155, %p156
      %p159 = scmp.ne.s32.totalorder %s142, %s158
      %p160 = scmp.eq.s32.totalorder %s24, 0
      %p161 = por %p159, %p160
      %p162 = scmp.le.s32.totalorder 1, %s18
      %p163 = scmp.lt.s32.totalorder %s18, 3
      %p164 = pnand %p162, %p163
      %p165 = pneg %p164
      // Predicated region
      $region9: #{tpu_custom_call.1} parent=5 // pred_check
        _
      $region10: #{tpu_custom_call.1} parent=5 // pred_check_branch
        %167 = sbr.rel (%p164) target = $region12
      $region11: #{tpu_custom_call.1} parent=5 // pred_region
        %s168 = ssub.s32 %s18, 1
        // Predicated region
        $region13: #{tpu_custom_call.1} parent=11 // pred_check
          %p169 = pneg %p65
        $region14: #{tpu_custom_call.1} parent=11 // pred_check_branch
          %171 = sbr.rel (%p169) target = $region16
        $region15: #{tpu_custom_call.1} parent=11 // pred_region
          %173 = vsyncadd [#allocation6], 0
          %s175 = sshll.u32 %s1, 4
          %s176 = int_to_ptr.hbm [resolvable:$true] %s175
          %s177 = sshll.u32 [#allocation5], 4
          %s178 = int_to_ptr.vmem [resolvable:$true] %s177
          %180 = dma.hbm_to_vmem [thread:$0]  %s176, 64, %s178, [#allocation6]
        $region16: #{tpu_custom_call.1} parent=11 // pred_fallthru
          _
        // Predicated region
        $region17: #{tpu_custom_call.1} parent=11 // pred_check
          %p181 = pneg %p86
        $region18: #{tpu_custom_call.1} parent=11 // pred_check_branch
          %183 = sbr.rel (%p181) target = $region20
        $region19: #{tpu_custom_call.1} parent=11 // pred_region
          _
        $region20: #{tpu_custom_call.1} parent=11 // pred_fallthru
          _
        // Predicated region
        $region21: #{tpu_custom_call.1} parent=11 // pred_check
          %p184 = pneg %p107
        $region22: #{tpu_custom_call.1} parent=11 // pred_check_branch
          %186 = sbr.rel (%p184) target = $region24
        $region23: #{tpu_custom_call.1} parent=11 // pred_region
          _
        $region24: #{tpu_custom_call.1} parent=11 // pred_fallthru
          _
        // Predicated region
        $region25: #{tpu_custom_call.1} parent=11 // pred_check
          %p187 = pneg %p128
        $region26: #{tpu_custom_call.1} parent=11 // pred_check_branch
          %189 = sbr.rel (%p187) target = $region28
        $region27: #{tpu_custom_call.1} parent=11 // pred_region
          _
        $region28: #{tpu_custom_call.1} parent=11 // pred_fallthru
          _
      $region12: #{tpu_custom_call.1} parent=5 // pred_fallthru
        _
      %p190 = scmp.lt.s32.totalorder %s18, 2
      // Predicated region
      $region29: #{tpu_custom_call.1} parent=5 // pred_check
        %p191 = pneg %p190
      $region30: #{tpu_custom_call.1} parent=5 // pred_check_branch
        %193 = sbr.rel (%p191) target = $region32
      $region31: #{tpu_custom_call.1} parent=5 // pred_region
        // Predicated region
        $region33: #{tpu_custom_call.1} parent=31 // pred_check
          %p194 = pneg %p38
        $region34: #{tpu_custom_call.1} parent=31 // pred_check_branch
          %196 = sbr.rel (%p194) target = $region36
        $region35: #{tpu_custom_call.1} parent=31 // pred_region
          %s197 = sand.u32 %s28, 1
          %s198 = scalar_lea.sflag [#allocation3], %s197
          %s199 = sand.u32 %s28, 1
          %s200 = smul.addr %s199, 4
          %s201 = scalar_lea.vmem [#allocation2], %s200
          %203 = vsyncadd %s198, 0
          %s204 = smul.addr %s18, 4
          %s205 = scalar_lea.hbm %s0, %s204
          %s207 = sshll.u32 %s205, 4
          %s208 = int_to_ptr.hbm [resolvable:$true] %s207
          %s209 = sshll.u32 %s201, 4
          %s210 = int_to_ptr.vmem [resolvable:$true] %s209
          %212 = dma.hbm_to_vmem [thread:$0]  %s208, 64, %s210, %s198
        $region36: #{tpu_custom_call.1} parent=31 // pred_fallthru
          _
      $region32: #{tpu_custom_call.1} parent=5 // pred_fallthru
        _
      %p213 = scmp.le.s32.totalorder 1, %s18
      %p214 = scmp.lt.s32.totalorder %s18, 3
      %p215 = pnand %p213, %p214
      %p216 = pneg %p215
      // Predicated region
      $region37: #{tpu_custom_call.1} parent=5 // pred_check
        _
      $region38: #{tpu_custom_call.1} parent=5 // pred_check_branch
        %218 = sbr.rel (%p215) target = $region40
      $region39: #{tpu_custom_call.1} parent=5 // pred_region
        %s219 = ssub.s32 %s18, 1
        %s220 = sand.u32 %s31, 1
        %s221 = scalar_lea.sflag [#allocation3], %s220
        %s222 = sand.u32 %s31, 1
        %s223 = smul.addr %s222, 4
        %s224 = scalar_lea.vmem [#allocation2], %s223
        // Predicated region
        $region41: #{tpu_custom_call.1} parent=39 // pred_check
          %p225 = pneg %p44
        $region42: #{tpu_custom_call.1} parent=39 // pred_check_branch
          %227 = sbr.rel (%p225) target = $region44
        $region43: #{tpu_custom_call.1} parent=39 // pred_region
          %229 = dma.done %s221, 64
        $region44: #{tpu_custom_call.1} parent=39 // pred_fallthru
          _
        // Predicated region
        $region45: #{tpu_custom_call.1} parent=39 // pred_check
          %p230 = pneg %p65
        $region46: #{tpu_custom_call.1} parent=39 // pred_check_branch
          %232 = sbr.rel (%p230) target = $region48
        $region47: #{tpu_custom_call.1} parent=39 // pred_region
          %234 = dma.done [#allocation6], 64
        $region48: #{tpu_custom_call.1} parent=39 // pred_fallthru
          _
        %s235 = sand.u32 %s31, 1
        %s236 = scalar_lea.sflag [#allocation3], %s235
        %s237 = sand.u32 %s31, 1
        %s238 = smul.addr %s237, 4
        %s239 = scalar_lea.vmem [#allocation2], %s238
        %p240 = pneg %p44
        %p241 = pneg %p41
        %p242 = pneg %p65
        %p243 = pneg %p62
        %p244 = pneg %p86
        %p245 = pneg %p83
        %p246 = pneg %p107
        %p247 = pneg %p104
        %p248 = pneg %p128
        %p249 = pneg %p125
        %p250 = pneg %p154
        %p251 = pneg %p151
        %s252 = sand.u32 %s141, 1
        %s253 = scalar_lea.sflag [#allocation4], %s252
        %s254 = sand.u32 %s141, 1
        %s255 = smul.addr %s254, 4
        %s256 = scalar_lea.vmem [#allocation7], %s255
        %v257 = vld [vmem:[%s224] sm:$0xf]
        %v258 = vunpack.c.l.bf16 %v257
        %v259 = vld [vmem:[#allocation5] sm:$0xf]
        %v260 = vunpack.c.l.bf16 %v259
        %v261 = vadd.f32 %v258, %v260
        %v262 = vld [vmem:[%s2] sm:$0x1]
        %v263 = vunpack.c.l.bf16 %v262
        %v264 = vperm.slane %v263, 0
        %v265 = vadd.f32 %v261, %v264
        %vm266 = vcmask 523264
        %v267 = vsel %vm266, %v265, 0.0
        %268 = vadd.xlane.f32.xlu0 %v267
        %v269 = vpop.xlane.xlu0 %268
        %v270 = vrcp.pop 64.0
        %v271 = vmul.f32 64.0, %v270
        %v272 = vsub.f32 1.0, %v271
        %v273 = vmul.f32 %v270, %v272
        %v274 = vadd.f32 %v270, %v273
        %vm275 = vweird.f32 %v270
        %v276 = vsel %vm275, %v270, %v274
        %v277 = vmul.f32 %v269, %v276
        %v278 = vsub.f32 %v265, %v277
        %v279 = vmul.f32 %v278, %v278
        %v280 = vsel %vm266, %v279, 0.0
        %281 = vadd.xlane.f32.xlu0 %v280
        %v282 = vpop.xlane.xlu0 %281
        %v283 = vmul.f32 %v282, %v276
        %v284 = vadd.f32 %v283, 1e-12
        %v285 = vrsqrt.pop %v284
        %v286 = vmul.f32 %v285, %v284
        %v287 = vmul.f32 %v286, %v285
        %v288 = vmul.f32 0.5, %v287
        %v289 = vsub.f32 1.5, %v288
        %v290 = vmul.f32 %v285, %v289
        %vm291 = vweird.f32 %v284
        %vm292 = vweird.f32 %v285
        %vm293 = vmor %vm291, %vm292
        %v294 = vsel %vm293, %v285, %v290
        %v295 = vmul.f32 %v278, %v294
        %v296 = vld [vmem:[%s3] sm:$0x1]
        %v298 = vperm.slane %v296, 0
        %v300 = vmul.f32 %v295, %v298
        %v301 = vld [vmem:[%s4] sm:$0x1]
        %v303 = vperm.slane %v301, 0
        %v305 = vadd.f32 %v300, %v303
        %v306 = vpack.c.bf16 %v305, %v305
        %vm307 = vcmask 519168
        %308 = vst.msk [vmem:[%s256] sm:$0xf] %vm307, %v306
        %s309 = sand.u32 %s141, 1
        %s310 = scalar_lea.sflag [#allocation4], %s309
        %s311 = sand.u32 %s141, 1
        %s312 = smul.addr %s311, 4
        %s313 = scalar_lea.vmem [#allocation7], %s312
        // Predicated region
        $region49: #{tpu_custom_call.1} parent=39 // pred_check
          %p314 = pneg %p151
        $region50: #{tpu_custom_call.1} parent=39 // pred_check_branch
          %316 = sbr.rel (%p314) target = $region52
        $region51: #{tpu_custom_call.1} parent=39 // pred_region
          %318 = vsyncadd %s310, 0
          %s319 = smul.addr %s23, 4
          %s320 = scalar_lea.hbm %s5, %s319
          %s322 = sshll.u32 %s313, 4
          %s323 = int_to_ptr.vmem [resolvable:$true] %s322
          %s324 = sshll.u32 %s320, 4
          %s325 = int_to_ptr.hbm [resolvable:$true] %s324
          %327 = dma.vmem_to_hbm [thread:$0]  %s323, 64, %s325, %s310
        $region52: #{tpu_custom_call.1} parent=39 // pred_fallthru
          _
      $region40: #{tpu_custom_call.1} parent=5 // pred_fallthru
        _
      %p328 = scmp.le.s32.totalorder 2, %s18
      // Predicated region
      $region53: #{tpu_custom_call.1} parent=5 // pred_check
        %p329 = pneg %p328
      $region54: #{tpu_custom_call.1} parent=5 // pred_check_branch
        %331 = sbr.rel (%p329) target = $region56
      $region55: #{tpu_custom_call.1} parent=5 // pred_region
        %s332 = ssub.s32 %s18, 2
        // Predicated region
        $region57: #{tpu_custom_call.1} parent=55 // pred_check
          %p333 = pneg %p157
        $region58: #{tpu_custom_call.1} parent=55 // pred_check_branch
          %335 = sbr.rel (%p333) target = $region60
        $region59: #{tpu_custom_call.1} parent=55 // pred_region
          %s336 = sand.u32 %s142, 1
          %s337 = scalar_lea.sflag [#allocation4], %s336
          %s338 = sand.u32 %s142, 1
          %s339 = smul.addr %s338, 4
          %s340 = scalar_lea.vmem [#allocation7], %s339
          %342 = dma.done %s337, 64
        $region60: #{tpu_custom_call.1} parent=55 // pred_fallthru
          _
      $region56: #{tpu_custom_call.1} parent=5 // pred_fallthru
        _
    $region6: #{tpu_custom_call.1} parent=1 // loop_footer
      %s22 = sadd.s32 1, %s18
    $region7: #{tpu_custom_call.1} parent=1 // loop_footer_branch
      %17 = sbr.rel target = $region3
    $region8: #{tpu_custom_call.1} parent=1 // loop_exit
      _
    %343 = vsyncpa [#allocation3], 1
    %s344 = scalar_lea.sflag [#allocation3], 1
    %345 = vsyncpa %s344, 1
    %346 = vsyncpa [#allocation6], 1
    %347 = vsyncpa [#allocation4], 1
    %s348 = scalar_lea.sflag [#allocation4], 1
    %349 = vsyncpa %s348, 1

</llo_original>
